<compile_context>
chip_gen: v5e
topology: v5e:2x2
jax: 0.10.0
libtpu: 0.0.40
codegen_flags: <defaults>
</compile_context>

<pallas_src>
import jax
import jax.numpy as jnp
from jax.experimental import pallas as pl
from jax.experimental.pallas import tpu as pltpu


def _vae_kernel(x_ref, eps_ref, w_enc_ref, b_all_ref, w_dec_ref, out_ref):
    data_dim = x_ref.shape[1]
    latent = eps_ref.shape[1]
    dec_w = 2 * data_dim                 # lanes [0, dec_w) hold [res | logvarx]

    # ---- Fused encoder: one MXU matmul. w_enc is zero in the decoder lanes,
    #      so after adding the combined bias:
    #        lanes [0, dec_w)           = folded decoder bias (b_res | b_lvx)
    #        lanes [dec_w, dec_w+L)     = muz
    #        lanes [dec_w+L, dec_w+2L)  = logvarz
    enc = jnp.dot(x_ref[...], w_enc_ref[...],
                  preferred_element_type=jnp.float32) + b_all_ref[...]

    muz = enc[:, dec_w:dec_w + latent]                       # (TILE_B, L)
    logvarz = enc[:, dec_w + latent:dec_w + 2 * latent]      # (TILE_B, L)

    # ---- Reparametrize (n_samples=1; eps supplied from host RNG) ----
    z = eps_ref[...] * jnp.exp(0.5 * logvarz) + muz          # (TILE_B, L)

    # ---- Folded linear decoder on the (otherwise idle) MXU. w_dec is zero in
    #      the latent lanes, so muz/logvarz pass through untouched and the
    #      result is the complete packed slab in one lane-contiguous store. ----
    out_ref[...] = enc + jnp.dot(z, w_dec_ref[...],
                                 preferred_element_type=jnp.float32)


def pack_params(params):
    """Fuse the encoder and fold the purely-linear decoder into the packed
    72-lane output layout [res(D) | logvarx(D) | muz(L) | logvarz(L)].
    Input weights are PyTorch Linears already transposed to
    (in_features, out_features); biases are (1, out_features)."""
    D = params["we_mu"].shape[0]     # data_dim
    L = params["we_mu"].shape[1]     # latent_dim
    dec_w = 2 * D
    out_w = dec_w + 2 * L            # 72 for (D=32, L=4)

    # Encoder -> one matmul producing [0(2D) | muz(L) | logvarz(L)]
    w_enc = jnp.zeros((D, out_w), jnp.float32)
    w_enc = w_enc.at[:, dec_w:dec_w + L].set(params["we_mu"])
    w_enc = w_enc.at[:, dec_w + L:dec_w + 2 * L].set(params["we_lv"])

    # Decoder (all-linear, nonlinearity=False) -> precompose both heads.
    # NOTE: folding changes fp rounding in the last ulps vs the sequential
    # PyTorch matmul order (well within 1e-4).
    w_res = params["wd0"] @ params["wd1"]                   # (L, D)
    w_lvx = params["wd0"] @ params["wd2"]                   # (L, D)
    b_res = params["bd0"] @ params["wd1"] + params["bd1"]   # (1, D)
    b_lvx = params["bd0"] @ params["wd2"] + params["bd2"]   # (1, D)
    w_dec = jnp.zeros((L, out_w), jnp.float32)
    w_dec = w_dec.at[:, :D].set(w_res)
    w_dec = w_dec.at[:, D:dec_w].set(w_lvx)

    # Combined bias: encoder bias and folded decoder bias occupy disjoint
    # lanes, so one add in the kernel handles both.
    b_all = jnp.zeros((1, out_w), jnp.float32)
    b_all = b_all.at[:, :D].set(b_res)
    b_all = b_all.at[:, D:dec_w].set(b_lvx)
    b_all = b_all.at[:, dec_w:dec_w + L].set(params["be_mu"])
    b_all = b_all.at[:, dec_w + L:dec_w + 2 * L].set(params["be_lv"])

    return w_enc, b_all, w_dec


def _pick_tile_b(batch, target=8192):
    """Batch tile: large (amortizes per-step overhead), but capped at
    ~batch/2 so the 'parallel' batch axis always has >= 2 grid steps on v7x
    whenever there is enough work to split. Multiple of 8 for sublane
    alignment; ragged last blocks are handled by pl.cdiv + Pallas masking."""
    if batch <= 8:
        return batch                       # single tiny full-extent block
    half = -(-batch // 2)                  # ceil(batch / 2)
    half = -(-half // 8) * 8               # round up to a multiple of 8
    return min(target, half)


def vae_forward(x, eps, packed_params):
    """Runs the fused VAE forward kernel. Returns (res, logvarx, muz, logvarz)."""
    w_enc, b_all, w_dec = packed_params
    batch, data_dim = x.shape
    latent = eps.shape[1]
    out_w = w_enc.shape[1]
    dec_w = 2 * data_dim

    tile_b = _pick_tile_b(batch)
    grid = (pl.cdiv(batch, tile_b),)

    out = pl.pallas_call(
        _vae_kernel,
        out_shape=jax.ShapeDtypeStruct((batch, out_w), jnp.float32),
        grid=grid,
        in_specs=[
            pl.BlockSpec((tile_b, data_dim), lambda i: (i, 0)),  # x: streamed over batch
            pl.BlockSpec((tile_b, latent), lambda i: (i, 0)),    # eps: streamed over batch
            pl.BlockSpec(w_enc.shape, lambda i: (0, 0)),         # weights stay VMEM-resident
            pl.BlockSpec(b_all.shape, lambda i: (0, 0)),
            pl.BlockSpec(w_dec.shape, lambda i: (0, 0)),
        ],
        out_specs=pl.BlockSpec((tile_b, out_w), lambda i: (i, 0)),
        compiler_params=pltpu.CompilerParams(
            dimension_semantics=("parallel",),      # v7x: shard batch over both TCs
            vmem_limit_bytes=32 * 1024 * 1024,      # explicit; ~7 MiB used at tile_b=8192
        ),
    )(x, eps, w_enc, b_all, w_dec)

    # Unpack the packed slab in the wrapper (cheap XLA slices).
    res = out[:, :data_dim]
    logvarx = out[:, data_dim:dec_w]
    muz = out[:, dec_w:dec_w + latent]
    logvarz = out[:, dec_w + latent:dec_w + 2 * latent]
    return res, logvarx, muz, logvarz


def _linear_init(key, out_features, in_features):
    """Deterministic PyTorch-style init: U(-1/sqrt(fan_in), 1/sqrt(fan_in)).
    Returns (W_transposed[in,out], b[1,out])."""
    kw, kb = jax.random.split(key)
    bound = 1.0 / jnp.sqrt(jnp.float32(in_features))
    w = jax.random.uniform(kw, (out_features, in_features), jnp.float32, -bound, bound)
    b = jax.random.uniform(kb, (out_features,), jnp.float32, -bound, bound)
    return w.T, b.reshape(1, out_features)


def _reference(x, eps, raw):
    # Pure-JAX reference with the original (unfused, unfolded) math order.
    muz = x @ raw["we_mu"] + raw["be_mu"]
    logvarz = x @ raw["we_lv"] + raw["be_lv"]
    z = eps * jnp.exp(0.5 * logvarz) + muz
    h = z @ raw["wd0"] + raw["bd0"]
    res = h @ raw["wd1"] + raw["bd1"]
    logvarx = h @ raw["wd2"] + raw["bd2"]
    return res, logvarx, muz, logvarz


if __name__ == "__main__":
    B = 8
    data_dim = 32
    latent_dim = 4
    hidden = 2  # hard-coded hidden width in Decoder (Linear(latent_dim, 2))

    root = jax.random.PRNGKey(0)
    k_x, k_eps, k_e1, k_e2, k_d0, k_d1, k_d2 = jax.random.split(root, 7)

    # Inputs
    x = jax.random.normal(k_x, (B, data_dim), jnp.float32)
    # reparametrize draws eps of shape (n_samples=1, B, latent_dim) then flattens.
    eps = jax.random.normal(k_eps, (1, B, latent_dim), jnp.float32).reshape(B, latent_dim)

    # Parameters (deterministic, PyTorch Linear shapes, pre-transposed to (in, out))
    we_mu, be_mu = _linear_init(k_e1, latent_dim, data_dim)   # Encoder.fc1
    we_lv, be_lv = _linear_init(k_e2, latent_dim, data_dim)   # Encoder.fc2
    wd0, bd0 = _linear_init(k_d0, hidden, latent_dim)         # Decoder.layers[0]
    wd1, bd1 = _linear_init(k_d1, data_dim, hidden)           # Decoder.layers[1]
    wd2, bd2 = _linear_init(k_d2, data_dim, hidden)           # Decoder.layers[2] (dlogvarx)

    raw = dict(we_mu=we_mu, be_mu=be_mu, we_lv=we_lv, be_lv=be_lv,
               wd0=wd0, bd0=bd0, wd1=wd1, bd1=bd1, wd2=wd2, bd2=bd2)
    packed = pack_params(raw)

    res, logvarx, muz, logvarz = jax.block_until_ready(vae_forward(x, eps, packed))

    # Sanity check against pure-JAX reference (original op order)
    r_res, r_logvarx, r_muz, r_logvarz = _reference(x, eps, raw)
    assert res.shape == (B, data_dim) and logvarx.shape == (B, data_dim)
    assert muz.shape == (B, latent_dim) and logvarz.shape == (B, latent_dim)
    for got, want in ((res, r_res), (logvarx, r_logvarx),
                      (muz, r_muz), (logvarz, r_logvarz)):
        assert jnp.allclose(got, want, rtol=1e-4, atol=1e-4), \
            float(jnp.max(jnp.abs(got - want)))

    print("KERNEL_OK")
</pallas_src>

<mosaic_0001>
module attributes {stable_mosaic.version = 11 : i64} {
  func.func @_vae_kernel(%arg0: i32, %arg1: memref<8x32xf32, #tpu.memory_space<vmem>>, %arg2: memref<8x4xf32, #tpu.memory_space<vmem>>, %arg3: memref<32x72xf32, #tpu.memory_space<vmem>>, %arg4: memref<1x72xf32, #tpu.memory_space<vmem>>, %arg5: memref<4x72xf32, #tpu.memory_space<vmem>>, %arg6: memref<8x72xf32, #tpu.memory_space<vmem>>) attributes {dimension_semantics = [#tpu.dimension_semantics<parallel>], iteration_bounds = array<i64: 1>, scalar_prefetch = 0 : i64, scratch_operands = 0 : i64, tpu.core_type = #tpu.core_type<tc>, window_params = [{transform_indices = @transform_0, window_bounds = array<i64: 8, 32>}, {transform_indices = @transform_1, window_bounds = array<i64: 8, 4>}, {pipeline_mode = #tpu.pipeline_mode<synchronous>, transform_indices = @transform_2, window_bounds = array<i64: 32, 72>}, {pipeline_mode = #tpu.pipeline_mode<synchronous>, transform_indices = @transform_3, window_bounds = array<i64: 1, 72>}, {pipeline_mode = #tpu.pipeline_mode<synchronous>, transform_indices = @transform_4, window_bounds = array<i64: 4, 72>}, {transform_indices = @transform_5, window_bounds = array<i64: 8, 72>}]} {
    %c0 = arith.constant 0 : index
    %c0_0 = arith.constant 0 : index
    %0 = vector.load %arg1[%c0, %c0_0] : memref<8x32xf32, #tpu.memory_space<vmem>>, vector<8x32xf32>
    %c0_1 = arith.constant 0 : index
    %c0_2 = arith.constant 0 : index
    %1 = vector.load %arg3[%c0_1, %c0_2] : memref<32x72xf32, #tpu.memory_space<vmem>>, vector<32x72xf32>
    %cst = arith.constant dense<0.000000e+00> : vector<8x72xf32>
    %2 = tpu.matmul %0, %1, %cst {dimension_numbers = #tpu.dot_dimension_numbers<[1], [0], [0], [1], [0, 0, 1, 1], [], []>} : vector<8x32xf32>, vector<32x72xf32>, vector<8x72xf32> -> vector<8x72xf32>
    %c0_3 = arith.constant 0 : index
    %c0_4 = arith.constant 0 : index
    %3 = vector.load %arg4[%c0_3, %c0_4] : memref<1x72xf32, #tpu.memory_space<vmem>>, vector<1x72xf32>
    %4 = vector.broadcast %3 : vector<1x72xf32> to vector<8x72xf32>
    %5 = arith.addf %2, %4 : vector<8x72xf32>
    %6 = vector.extract_strided_slice %5 {offsets = [0, 64], sizes = [8, 4], strides = [1, 1]} : vector<8x72xf32> to vector<8x4xf32>
    %7 = vector.extract_strided_slice %5 {offsets = [0, 68], sizes = [8, 4], strides = [1, 1]} : vector<8x72xf32> to vector<8x4xf32>
    %c0_5 = arith.constant 0 : index
    %c0_6 = arith.constant 0 : index
    %8 = vector.load %arg2[%c0_5, %c0_6] : memref<8x4xf32, #tpu.memory_space<vmem>>, vector<8x4xf32>
    %cst_7 = arith.constant 5.000000e-01 : f32
    %9 = vector.broadcast %cst_7 : f32 to vector<8x4xf32>
    %10 = arith.mulf %9, %7 : vector<8x4xf32>
    %11 = math.exp %10 : vector<8x4xf32>
    %12 = arith.mulf %8, %11 : vector<8x4xf32>
    %13 = arith.addf %12, %6 : vector<8x4xf32>
    %c0_8 = arith.constant 0 : index
    %c0_9 = arith.constant 0 : index
    %14 = vector.load %arg5[%c0_8, %c0_9] : memref<4x72xf32, #tpu.memory_space<vmem>>, vector<4x72xf32>
    %cst_10 = arith.constant dense<0.000000e+00> : vector<8x72xf32>
    %15 = tpu.matmul %13, %14, %cst_10 {dimension_numbers = #tpu.dot_dimension_numbers<[1], [0], [0], [1], [0, 0, 1, 1], [], []>} : vector<8x4xf32>, vector<4x72xf32>, vector<8x72xf32> -> vector<8x72xf32>
    %16 = arith.addf %5, %15 : vector<8x72xf32>
    %c0_11 = arith.constant 0 : index
    %c0_12 = arith.constant 0 : index
    %17 = vector.load %arg6[%c0_11, %c0_12] : memref<8x72xf32, #tpu.memory_space<vmem>>, vector<8x72xf32>
    tpu.vector_store %arg6[%c0_11, %c0_12], %16 {strides = array<i32>} : memref<8x72xf32, #tpu.memory_space<vmem>>, vector<8x72xf32>,
    return
  }
  func.func @transform_0(%arg0: i32) -> (i32, i32) {
    %c0_i32 = arith.constant 0 : i32
    %c0_i32_0 = arith.constant 0 : i32
    return %arg0, %c0_i32 : i32, i32
  }
  func.func @transform_1(%arg0: i32) -> (i32, i32) {
    %c0_i32 = arith.constant 0 : i32
    %c0_i32_0 = arith.constant 0 : i32
    return %arg0, %c0_i32 : i32, i32
  }
  func.func @transform_2(%arg0: i32) -> (i32, i32) {
    %c0_i32 = arith.constant 0 : i32
    %c0_i32_0 = arith.constant 0 : i32
    %c0_i32_1 = arith.constant 0 : i32
    return %c0_i32, %c0_i32_0 : i32, i32
  }
  func.func @transform_3(%arg0: i32) -> (i32, i32) {
    %c0_i32 = arith.constant 0 : i32
    %c0_i32_0 = arith.constant 0 : i32
    %c0_i32_1 = arith.constant 0 : i32
    return %c0_i32, %c0_i32_0 : i32, i32
  }
  func.func @transform_4(%arg0: i32) -> (i32, i32) {
    %c0_i32 = arith.constant 0 : i32
    %c0_i32_0 = arith.constant 0 : i32
    %c0_i32_1 = arith.constant 0 : i32
    return %c0_i32, %c0_i32_0 : i32, i32
  }
  func.func @transform_5(%arg0: i32) -> (i32, i32) {
    %c0_i32 = arith.constant 0 : i32
    %c0_i32_0 = arith.constant 0 : i32
    return %arg0, %c0_i32 : i32, i32
  }
}

</mosaic_0001>

<llo_original>
// kernel: tpu_custom_call.1
$region0: #{tpu_custom_call.1}
  #allocation0 [shape = 'u32[]', space=smem, size = 0x4, offset = 0x4, fixed_abs, tag = 'smem constant byte address 0x4 - core index']
  #allocation1 [shape = 'u32[72,128]{1,0:T(1,128)}', space=vmem, size = 0x9000, scoped, tag = 'internal scratch']
  %s0 = inlined_call_operand.vmem [shape: f32[8,32], index: 0, kind: input, shape index: {}]
  %s1 = inlined_call_operand.vmem [shape: f32[8,4], index: 1, kind: input, shape index: {}]
  %s2 = inlined_call_operand.hbm [shape: f32[32,72], index: 2, kind: input, shape index: {}]
  %s3 = inlined_call_operand.vmem [shape: f32[1,72], index: 3, kind: input, shape index: {}]
  %s4 = inlined_call_operand.vmem [shape: f32[4,72], index: 4, kind: input, shape index: {}]
  %s5 = inlined_call_operand.hbm [shape: f32[8,72], index: 5, kind: output, shape index: {}]
  %s6 = sld [smem:[#allocation0]]
  $region34: #{tpu_custom_call.1} parent=0
    _
  %s8 = ssub.s32 1, %s6
  %s9 = scalar_select 0, %s8, %s6
  $region1: #{tpu_custom_call.1} parent=0
    #allocation2 [shape = 'u8[16384]{0}', space=vmem, size = 0x4000, scoped, tag = 'input window, operand 2, single buffered']
    #allocation3 [shape = 's32[1]{0}', space=sflag, size = 0x4, scoped, tag = 'scoped memory for tpu_custom_call.1']
    #allocation4 [shape = 's32[1]{0}', space=sflag, size = 0x4, scoped, tag = 'scoped memory for tpu_custom_call.1']
    #allocation5 [shape = 'u8[4096]{0}', space=vmem, size = 0x1000, scoped, tag = 'output window, operand 0, single buffered']
    %10 = vsyncpa [#allocation3], 0
    %11 = vsyncpa [#allocation4], 0
    // Predicated region
    $region2: #{tpu_custom_call.1} parent=1 // pred_check
      _
    $region3: #{tpu_custom_call.1} parent=1 // pred_check_branch
      %13 = sbr.rel (0) target = $region5
    $region4: #{tpu_custom_call.1} parent=1 // pred_region
      _
    $region5: #{tpu_custom_call.1} parent=1 // pred_fallthru
      _
    // Predicated region
    $region6: #{tpu_custom_call.1} parent=1 // pred_check
      _
    $region7: #{tpu_custom_call.1} parent=1 // pred_check_branch
      %15 = sbr.rel (0) target = $region9
    $region8: #{tpu_custom_call.1} parent=1 // pred_region
      _
    $region9: #{tpu_custom_call.1} parent=1 // pred_fallthru
      _
    // Predicated region
    $region10: #{tpu_custom_call.1} parent=1 // pred_check
      _
    $region11: #{tpu_custom_call.1} parent=1 // pred_check_branch
      %17 = sbr.rel (0) target = $region13
    $region12: #{tpu_custom_call.1} parent=1 // pred_region
      %19 = vsyncadd [#allocation3], 0
      %s20 = sshll.u32 %s2, 4
      %s21 = int_to_ptr.hbm [resolvable:$true] %s20
      %s22 = sshll.u32 [#allocation2], 4
      %s23 = int_to_ptr.vmem [resolvable:$true] %s22
      %28 = dma.hbm_to_vmem [thread:$0]  %s21, 512, %s23, [#allocation3], 128, 128, 8
    $region13: #{tpu_custom_call.1} parent=1 // pred_fallthru
      _
    // Predicated region
    $region14: #{tpu_custom_call.1} parent=1 // pred_check
      _
    $region15: #{tpu_custom_call.1} parent=1 // pred_check_branch
      %30 = sbr.rel (0) target = $region17
    $region16: #{tpu_custom_call.1} parent=1 // pred_region
      _
    $region17: #{tpu_custom_call.1} parent=1 // pred_fallthru
      _
    // Predicated region
    $region18: #{tpu_custom_call.1} parent=1 // pred_check
      _
    $region19: #{tpu_custom_call.1} parent=1 // pred_check_branch
      %32 = sbr.rel (0) target = $region21
    $region20: #{tpu_custom_call.1} parent=1 // pred_region
      _
    $region21: #{tpu_custom_call.1} parent=1 // pred_fallthru
      _
    // Predicated region
    $region22: #{tpu_custom_call.1} parent=1 // pred_check
      _
    $region23: #{tpu_custom_call.1} parent=1 // pred_check_branch
      %34 = sbr.rel (0) target = $region25
    $region24: #{tpu_custom_call.1} parent=1 // pred_region
      %36 = dma.done [#allocation3], 512
    $region25: #{tpu_custom_call.1} parent=1 // pred_fallthru
      _
    %v37 = vld [vmem:[%s0] sm:$0xff]
    %v38 = vld [vmem:[#allocation2] sm:$0xff]
    %v39 = vld [vmem:[#allocation2 + $0x8] sm:$0xff]
    %v40 = vld [vmem:[#allocation2 + $0x10] sm:$0xff]
    %v41 = vld [vmem:[#allocation2 + $0x18] sm:$0xff]
    %v42 = vld [vmem:[%s3] sm:$0x1]
    %v44 = vperm.slane %v42, 0
    %vm46 = vcmask 261120
    %v48 = vsel %vm46, %v37, 0
    %50 = vmatpush.msra.mxu0 0.0
    %51 = vmatpush.msra.mxu0 0.0
    %52 = vmatpush.msra.mxu0 0.0
    %53 = vmatpush.msra.mxu0 0.0
    %54 = vmatpush.msra.mxu0 0.0
    %55 = vmatpush.msra.mxu0 0.0
    %56 = vmatpush.msra.mxu0 0.0
    %57 = vmatpush.msra.mxu0 0.0
    %58 = vmatpush.msra.mxu0 0.0
    %59 = vmatpush.msra.mxu0 0.0
    %60 = vmatpush.msra.mxu0 0.0
    %61 = vmatpush.msra.mxu0 0.0
    %62 = vmatpush.msra.mxu0 %v41
    %63 = vmatpush.msra.mxu0 %v40
    %64 = vmatpush.msra.mxu0 %v39
    %65 = vmatpush.msra.mxu0 %v38
    %66 = vmatmul.f32.gmra.mxu0 %v48
    %v67 = vpop.f32.mrf.mxu0
    %v68 = vadd.f32 %v44, %v67
    %69 = vdwg.mxu0
    %v70 = vld [vmem:[%s1] sm:$0xff]
    %v71 = vmul.f32 %v68, 0.5
    %v72 = vmul.f32 %v71, 1.442695
    %v73 = vpow.pop %v72
    %75 = vrot.lane.b32.xlu0 %v73, 60
    %v76 = vpop.permute.xlu0 %75
    %v78 = vmul.f32 %v70, %v76
    %80 = vrot.lane.b32.xlu0 %v68, 64
    %v81 = vpop.permute.xlu0 %80
    %v83 = vadd.f32 %v78, %v81
    %v84 = vld [vmem:[%s4] sm:$0xf]
    %vm85 = vcmask 31744
    %v87 = vsel %vm85, %v83, 0
    %vm89 = vcmask 1043456
    %v91 = vsel %vm89, %v84, 0
    %93 = vmatpush.msra.mxu0 0.0
    %94 = vmatpush.msra.mxu0 0.0
    %95 = vmatpush.msra.mxu0 0.0
    %96 = vmatpush.msra.mxu0 0.0
    %97 = vmatpush.msra.mxu0 0.0
    %98 = vmatpush.msra.mxu0 0.0
    %99 = vmatpush.msra.mxu0 0.0
    %100 = vmatpush.msra.mxu0 0.0
    %101 = vmatpush.msra.mxu0 0.0
    %102 = vmatpush.msra.mxu0 0.0
    %103 = vmatpush.msra.mxu0 0.0
    %104 = vmatpush.msra.mxu0 0.0
    %105 = vmatpush.msra.mxu0 0.0
    %106 = vmatpush.msra.mxu0 0.0
    %107 = vmatpush.msra.mxu0 0.0
    %108 = vmatpush.msra.mxu0 %v91
    %109 = vmatmul.f32.gmra.mxu0 %v87
    %v110 = vpop.f32.mrf.mxu0
    %v111 = vadd.f32 0.0, %v110
    %112 = vdwg.mxu0
    %v113 = vadd.f32 %v68, %v111
    %vm114 = vcmask 588800
    %115 = vst.msk [vmem:[#allocation5] sm:$0xff] %vm114, %v113
    // Predicated region
    $region26: #{tpu_custom_call.1} parent=1 // pred_check
      _
    $region27: #{tpu_custom_call.1} parent=1 // pred_check_branch
      %117 = sbr.rel (0) target = $region29
    $region28: #{tpu_custom_call.1} parent=1 // pred_region
      %119 = vsyncadd [#allocation4], 0
      %s121 = sshll.u32 [#allocation5], 4
      %s122 = int_to_ptr.vmem [resolvable:$true] %s121
      %s123 = sshll.u32 %s5, 4
      %s124 = int_to_ptr.hbm [resolvable:$true] %s123
      %126 = dma.vmem_to_hbm [thread:$0]  %s122, 128, %s124, [#allocation4]
    $region29: #{tpu_custom_call.1} parent=1 // pred_fallthru
      _
    // Predicated region
    $region30: #{tpu_custom_call.1} parent=1 // pred_check
      _
    $region31: #{tpu_custom_call.1} parent=1 // pred_check_branch
      %128 = sbr.rel (0) target = $region33
    $region32: #{tpu_custom_call.1} parent=1 // pred_region
      %130 = dma.done [#allocation4], 128
    $region33: #{tpu_custom_call.1} parent=1 // pred_fallthru
      _
    %131 = vsyncpa [#allocation3], 1
    %132 = vsyncpa [#allocation4], 1

</llo_original>
